<compile_context>
chip_gen: v7x
topology: tpu7x:2x2x1
jax: 0.10.0
libtpu: 0.0.40
codegen_flags: <defaults>
</compile_context>

<pallas_src>
import math

import jax
import jax.numpy as jnp
from jax.experimental import pallas as pl
from jax.experimental.pallas import tpu as pltpu

_LANE = 128          # vreg lane width
_MAX_ROW_TILE = 1024 # cap on rows per block


def _min_sublane(dtype) -> int:
    """Minimum sublane tile for a dtype (8 f32, 16 bf16, 32 int8)."""
    return {4: 8, 2: 16, 1: 32}.get(jnp.dtype(dtype).itemsize, 8)


def _round_up(v: int, m: int) -> int:
    return ((v + m - 1) // m) * m


def _build_pe(max_len: int, d_model: int) -> jnp.ndarray:
    """Sinusoidal positional-encoding table, shape (max_len, d_model), f32."""
    position = jnp.arange(max_len, dtype=jnp.float32)[:, None]              # (L, 1)
    div_term = jnp.exp(
        jnp.arange(0, d_model, 2, dtype=jnp.float32) * (-math.log(10000.0) / d_model)
    )                                                                        # (ceil(D/2),)
    angles = position * div_term                                             # (L, ceil(D/2))
    pe = jnp.zeros((max_len, d_model), dtype=jnp.float32)
    pe = pe.at[:, 0::2].set(jnp.sin(angles))
    pe = pe.at[:, 1::2].set(jnp.cos(angles)[:, : d_model // 2])              # safe for odd D
    return pe


def make_pe_buffers(d_model: int, max_len: int = 5000, dtype=jnp.float32):
    """Analogue of the torch registered buffer.  Built and cast exactly once.

    Returns (pe_rows, pe_flat):
      pe_rows: (max_len, d_model)       -- row view for the (B*S, D) layout
      pe_flat: (1, max_len * d_model)   -- lane-dense view for the (B, S*D) layout
    NOTE: casting to a low-precision activation dtype (e.g. bf16) changes
    numerics slightly vs PyTorch's f32-buffer-then-promote behavior.
    """
    pe = _build_pe(max_len, d_model).astype(dtype)
    return pe, pe.reshape(1, max_len * d_model)


def _add_pe_kernel(x_ref, pe_ref, o_ref):
    # Pure VPU elementwise add on one lane-dense tile.  pe block is either
    # (tm, tn) (rows layout) or (1, tn) broadcast over the tile's rows
    # (lane-dense layout); the implicit broadcast is free filler at the HBM
    # roofline, so no explicit stride-0 load is needed.
    o_ref[...] = x_ref[...] + pe_ref[...]


def _vmem_ceiling_and_target(requested_target):
    """VMEM request ceiling (below physical) and per-block byte target."""
    try:
        vmem_cap = int(pltpu.get_tpu_info().vmem_capacity_bytes)
    except Exception:  # conservative fallback = v7x (64 MiB)
        vmem_cap = 64 << 20
    # Leave headroom for Mosaic internal scratch / semaphores.
    ceiling = vmem_cap - ((8 << 20) if vmem_cap <= (64 << 20) else (16 << 20))
    if requested_target is None:
        # Bigger blocks on 128 MiB parts (v5e/v6e); modest on v7x (64 MiB).
        requested_target = (8 << 20) if vmem_cap >= (96 << 20) else (4 << 20)
    # 6 padded buffers (double-buffered x / out / pe) + slack must fit.
    target = min(int(requested_target), max(1 << 20, (ceiling - (6 << 20)) // 6))
    return ceiling, max(1, target) if requested_target < (1 << 20) else (ceiling, target)[1], requested_target


def _vmem_budget_params(requested_target):
    try:
        vmem_cap = int(pltpu.get_tpu_info().vmem_capacity_bytes)
    except Exception:  # conservative fallback = v7x (64 MiB)
        vmem_cap = 64 << 20
    ceiling = vmem_cap - ((8 << 20) if vmem_cap <= (64 << 20) else (16 << 20))
    if requested_target is None:
        requested_target = (8 << 20) if vmem_cap >= (96 << 20) else (4 << 20)
    target = min(int(requested_target), max(1 << 20, (ceiling - (6 << 20)) // 6))
    return ceiling, target


def _forward_impl(x, pe_rows, pe_flat, *, target_block_bytes=None, donate_x=False):
    """x: (B, S, D); pe_rows: (max_len, D); pe_flat: (1, max_len*D).

    Returns x + pe[:S] (eval-mode dropout = identity).
    """
    B, S, D = x.shape
    max_len, d_pe = pe_rows.shape
    assert d_pe == D and max_len >= S
    assert pe_rows.dtype == x.dtype, "cast pe once in make_pe_buffers (hoisted)"

    itemsize = jnp.dtype(x.dtype).itemsize
    min_sub = _min_sublane(x.dtype)
    vmem_ceiling, target = _vmem_budget_params(target_block_bytes)

    # Layout choice.  Tiny batches (B < sublane tile) would leave most of every
    # vreg / vector store masked in the (B, S*D) view, so fold the batch into
    # the row axis instead and re-read pe once per batch (good trade for B<8).
    use_rows_layout = (B < min_sub) and (S % min_sub == 0) and (D % _LANE == 0)

    if use_rows_layout:
        # ------------------------- (B*S, D) rows layout ----------------------
        R = B * S
        x2 = x.reshape(R, D)
        pe2 = pe_rows                                        # (max_len, D)

        tn = min(D, max(_LANE, (target // (min_sub * itemsize)) // _LANE * _LANE))
        # Rows: largest divisor of S that is a multiple of min_sub and keeps
        # the block within target (small trace-time loop over S/min_sub).
        max_tm = min(S, _MAX_ROW_TILE, max(min_sub, target // (tn * itemsize)))
        tm = min_sub
        t = min_sub
        while t <= max_tm:
            if S % t == 0:
                tm = t
            t += min_sub

        n_row = R // tm                                      # exact: tm | S | R
        n_col = pl.cdiv(D, tn)
        n_pe_row_blocks = S // tm

        block_bytes = tm * tn * itemsize                     # tm already sublane-aligned
        budget = 6 * block_bytes + (4 << 20)                 # 2x x + 2x out + 2x pe + slack

        if n_pe_row_blocks == 1:
            pe_index_map = lambda jc, ir: (0, jc)
        else:
            pe_index_map = lambda jc, ir: (ir % n_pe_row_blocks, jc)

        x_spec = pl.BlockSpec((tm, tn), lambda jc, ir: (ir, jc))
        pe_spec = pl.BlockSpec((tm, tn), pe_index_map)
        out_spec = pl.BlockSpec((tm, tn), lambda jc, ir: (ir, jc))
        out_shape = jax.ShapeDtypeStruct((R, D), x.dtype)
    else:
        # ------------------------ (B, S*D) lane-dense layout -----------------
        N = S * D
        x2 = x.reshape(B, N)
        pe2 = pe_flat                                        # first S*D entries are used

        if B >= min_sub:
            tm = max(min_sub, min(B, _MAX_ROW_TILE) // min_sub * min_sub)
            padded_tm = tm                                   # multiple of min_sub
        else:
            tm = B                                           # full (tiny) batch dim
            padded_tm = _round_up(B, min_sub)                # VMEM pads to sublane tile
        n_row = pl.cdiv(B, tm)

        full_width_bytes = padded_tm * N * itemsize
        if N <= _LANE or N < 2 * _LANE or full_width_bytes <= target:
            tn = N                                           # single full-width stripe
        else:
            max_tn = max(_LANE, (target // (padded_tm * itemsize)) // _LANE * _LANE)
            tn = max(_LANE, min(max_tn, (N // _LANE) * _LANE))
        n_col = pl.cdiv(N, tn)

        block_bytes = padded_tm * tn * itemsize              # padding-aware
        pe_block_bytes = min_sub * tn * itemsize             # (1, tn) pads to min_sub rows
        budget = 4 * block_bytes + 2 * pe_block_bytes + (4 << 20)

        x_spec = pl.BlockSpec((tm, tn), lambda jc, ir: (ir, jc))
        # pe block index is constant along the fast (row) grid axis, so pe is
        # DMA'd exactly once per column stripe: total pe traffic == S*D bytes.
        pe_spec = pl.BlockSpec((1, tn), lambda jc, ir: (0, jc))
        out_spec = pl.BlockSpec((tm, tn), lambda jc, ir: (ir, jc))
        out_shape = jax.ShapeDtypeStruct((B, N), x.dtype)

    vmem_limit = int(min(budget, vmem_ceiling))

    out2 = pl.pallas_call(
        _add_pe_kernel,
        out_shape=out_shape,
        # Columns = slow axis, rows = fast (innermost) axis.
        grid=(n_col, n_row),
        in_specs=[x_spec, pe_spec],
        out_specs=out_spec,
        # "parallel" on both axes allows megacore sharding on v7x; no-op on
        # single-TC v5e/v6e.  (CORE_PARALLEL left as a follow-up if profiling
        # shows the grid is not being split across both v7x TensorCores.)
        compiler_params=pltpu.CompilerParams(
            dimension_semantics=("parallel", "parallel"),
            vmem_limit_bytes=vmem_limit,
        ),
        input_output_aliases=({0: 0} if donate_x else {}),
    )(x2, pe2)

    return out2.reshape(B, S, D)


# jit so the (B, S*D) / (B*S, D) reshapes are free views inside the program.
positional_encoding_forward = jax.jit(
    _forward_impl, static_argnames=("target_block_bytes", "donate_x"))


if __name__ == "__main__":
    key = jax.random.PRNGKey(0)
    k0, k1, k2 = jax.random.split(key, 3)

    # Case 1: shapes consistent with the module — batch=2, seq=8, d_model=32.
    B, S, D, MAX_LEN = 2, 8, 32, 64
    pe_rows, pe_flat = make_pe_buffers(D, MAX_LEN, jnp.float32)
    x = jax.random.normal(k0, (B, S, D), dtype=jnp.float32)
    ref = x + pe_rows[None, :S, :]
    y = jax.block_until_ready(positional_encoding_forward(x, pe_rows, pe_flat))
    assert y.shape == (B, S, D)
    assert jnp.allclose(y, ref, atol=1e-6), "mismatch (lane-dense layout, tiny B)"

    # Case 2: tiny batch with lane-aligned D -> (B*S, D) rows layout.
    B2, S2, D2, L2 = 2, 16, 128, 64
    pe_rows2, pe_flat2 = make_pe_buffers(D2, L2, jnp.float32)
    x2 = jax.random.normal(k1, (B2, S2, D2), dtype=jnp.float32)
    ref2 = x2 + pe_rows2[None, :S2, :]
    y2 = jax.block_until_ready(positional_encoding_forward(x2, pe_rows2, pe_flat2))
    assert jnp.allclose(y2, ref2, atol=1e-6), "mismatch (rows layout)"

    # Case 3: ragged cdiv tiling (B=10 rows, N=600 cols not tile multiples).
    B3, S3, D3, L3 = 10, 6, 100, 32
    pe_rows3, pe_flat3 = make_pe_buffers(D3, L3, jnp.float32)
    x3 = jax.random.normal(k2, (B3, S3, D3), dtype=jnp.float32)
    ref3 = x3 + pe_rows3[None, :S3, :]
    y3 = jax.block_until_ready(
        positional_encoding_forward(x3, pe_rows3, pe_flat3, target_block_bytes=4096))
    assert jnp.allclose(y3, ref3, atol=1e-6), "mismatch (ragged cdiv tiling)"

    print("KERNEL_OK")
</pallas_src>

<mosaic_0001>
module attributes {stable_mosaic.version = 11 : i64} {
  func.func @_add_pe_kernel(%arg0: i32, %arg1: i32, %arg2: memref<2x256xf32, #tpu.memory_space<vmem>>, %arg3: memref<1x256xf32, #tpu.memory_space<vmem>>, %arg4: memref<2x256xf32, #tpu.memory_space<vmem>>) attributes {dimension_semantics = [#tpu.dimension_semantics<parallel>, #tpu.dimension_semantics<parallel>], iteration_bounds = array<i64: 1, 1>, scalar_prefetch = 0 : i64, scratch_operands = 0 : i64, tpu.core_type = #tpu.core_type<tc>, window_params = [{transform_indices = @transform_0, window_bounds = array<i64: 2, 256>}, {transform_indices = @transform_1, window_bounds = array<i64: 1, 256>}, {transform_indices = @transform_2, window_bounds = array<i64: 2, 256>}]} {
    %c0 = arith.constant 0 : index
    %c0_0 = arith.constant 0 : index
    %0 = vector.load %arg2[%c0, %c0_0] : memref<2x256xf32, #tpu.memory_space<vmem>>, vector<2x256xf32>
    %c0_1 = arith.constant 0 : index
    %c0_2 = arith.constant 0 : index
    %1 = vector.load %arg3[%c0_1, %c0_2] : memref<1x256xf32, #tpu.memory_space<vmem>>, vector<1x256xf32>
    %2 = vector.broadcast %1 : vector<1x256xf32> to vector<2x256xf32>
    %3 = arith.addf %0, %2 : vector<2x256xf32>
    %c0_3 = arith.constant 0 : index
    %c0_4 = arith.constant 0 : index
    %4 = vector.load %arg4[%c0_3, %c0_4] : memref<2x256xf32, #tpu.memory_space<vmem>>, vector<2x256xf32>
    tpu.vector_store %arg4[%c0_3, %c0_4], %3 {strides = array<i32>} : memref<2x256xf32, #tpu.memory_space<vmem>>, vector<2x256xf32>,
    return
  }
  func.func @transform_0(%arg0: i32, %arg1: i32) -> (i32, i32) {
    %c0_i32 = arith.constant 0 : i32
    return %arg1, %arg0 : i32, i32
  }
  func.func @transform_1(%arg0: i32, %arg1: i32) -> (i32, i32) {
    %c0_i32 = arith.constant 0 : i32
    %c0_i32_0 = arith.constant 0 : i32
    return %c0_i32, %arg0 : i32, i32
  }
  func.func @transform_2(%arg0: i32, %arg1: i32) -> (i32, i32) {
    %c0_i32 = arith.constant 0 : i32
    return %arg1, %arg0 : i32, i32
  }
}

</mosaic_0001>

<llo_original>
// kernel: _forward_impl.1
$region0: #{_forward_impl.1}
  #allocation0 [shape = 'u32[]', space=smem, size = 0x4, offset = 0x4, fixed_abs, tag = 'smem constant byte address 0x4 - core index']
  #allocation1 [shape = 'u32[144,128]{1,0:T(1,128)}', space=vmem, size = 0x12000, scoped, tag = 'internal scratch']
  %s0 = inlined_call_operand.vmem [shape: f32[2,256], index: 0, kind: input, shape index: {}]
  %s1 = inlined_call_operand.vmem [shape: f32[1,2048], index: 1, kind: input, shape index: {}]
  %s2 = inlined_call_operand.vmem [shape: f32[2,256], index: 2, kind: output, shape index: {}]
  %s3 = sld [smem:[#allocation0]]
  $region18: #{_forward_impl.1} parent=0
    _
  %s5 = ssub.s32 1, %s3
  %s6 = scalar_select 0, %s5, %s3
  // Predicated region
  $region2: #{_forward_impl.1} parent=0 // pred_check
    _
  $region3: #{_forward_impl.1} parent=0 // pred_check_branch
    %8 = sbr.rel (0) target = $region5
  $region4: #{_forward_impl.1} parent=0 // pred_region
    _
  $region5: #{_forward_impl.1} parent=0 // pred_fallthru
    _
  // Predicated region
  $region6: #{_forward_impl.1} parent=0 // pred_check
    _
  $region7: #{_forward_impl.1} parent=0 // pred_check_branch
    %10 = sbr.rel (0) target = $region9
  $region8: #{_forward_impl.1} parent=0 // pred_region
    _
  $region9: #{_forward_impl.1} parent=0 // pred_fallthru
    _
  %v11 = vld [vmem:[%s0] sm:$0xf]
  %v12 = vld [vmem:[%s1] sm:$0x3]
  %v14 = vlaneseq
  %v15 = vshrl.u32 %v14, 7
  %v16 = vsub.s32 0, %v15
  %v17 = vrot.slane %v12, %v16
  %v18 = vlaneseq
  %v19 = vshrl.u32 %v18, 7
  %v20 = vsub.s32 1, %v19
  %v21 = vrot.slane %v12, %v20
  %v22 = vcombine.low %v17, %v21
  %v24 = vunpack.c.l.s4 1983009808
  %v25 = vunpack.c.0.s8 %v24
  %v26 = vlaneseq
  %v27 = vshrl.u32 %v26, 7
  %v28 = vsub.s32 %v25, %v27
  %v29 = vrot.slane %v22, %v28
  %v31 = vadd.f32 %v11, %v29
  %32 = vst [vmem:[%s2] sm:$0xf] %v31
  // Predicated region
  $region10: #{_forward_impl.1} parent=0 // pred_check
    _
  $region11: #{_forward_impl.1} parent=0 // pred_check_branch
    %34 = sbr.rel (0) target = $region13
  $region12: #{_forward_impl.1} parent=0 // pred_region
    _
  $region13: #{_forward_impl.1} parent=0 // pred_fallthru
    _
  // Predicated region
  $region14: #{_forward_impl.1} parent=0 // pred_check
    _
  $region15: #{_forward_impl.1} parent=0 // pred_check_branch
    %36 = sbr.rel (0) target = $region17
  $region16: #{_forward_impl.1} parent=0 // pred_region
    _
  $region17: #{_forward_impl.1} parent=0 // pred_fallthru
    _

</llo_original>
